<compile_context>
chip_gen: v7x
topology: tpu7x:2x2x1
jax: 0.10.0
libtpu: 0.0.40
codegen_flags: <defaults>
</compile_context>

<pallas_src>
import functools

import jax
import jax.numpy as jnp
from jax.experimental import pallas as pl
from jax.experimental.pallas import tpu as pltpu


def _adcrnn_kernel(pfT_ref, pbT_ref, xT_ref, w_ref, b_ref, wlin_ref, blin_ref,
                   y_ref, *, K, F, C):
    """Feature-major (transposed) single-invocation kernel.

    pfT_ref : [N, N]  bf16   (D_out^{-1} A)^T   -- full-width stationary MXU operand
    pbT_ref : [N, N]  bf16   (D_in^{-1} A^T)^T
    xT_ref  : [F, N]  f32    X^T
    w_ref   : [2C, 2KF] f32  fused (z|h) x (hop, fwd|bwd) X-part weights, transposed
    b_ref   : [2C, 1]  f32   fused [bz; bh]
    wlin_ref: [C, 1]   f32   Linear weight, transposed
    blin_ref: [1, 1]   f32   Linear bias
    y_ref   : [1, N]   f32   y^T (lane-dense store; wrapper reshapes to [N, 1])
    """
    PfT = pfT_ref[...]
    PbT = pbT_ref[...]
    X32 = xT_ref[...]
    Xbf = X32.astype(jnp.bfloat16)

    # Chebyshev-style diffusion chains (T_0 = X, T_1 = P T_0, T_k = 2 P T_{k-1} - T_{k-2}),
    # computed once in feature-major orientation (Tt_k = Tt_{k-1} @ P^T) and shared by
    # both the z and h gates. Chains are kept in f32; only the dot operands are bf16.
    pieces = [X32, X32]                       # hop-0 fwd | bwd blocks (both are X)
    if K > 1:
        tf1 = jnp.dot(Xbf, PfT, preferred_element_type=jnp.float32)
        tb1 = jnp.dot(Xbf, PbT, preferred_element_type=jnp.float32)
        pieces += [tf1, tb1]
        tf_pp, tb_pp = X32, X32               # T_{k-2}
        tf_p, tb_p = tf1, tb1                 # T_{k-1}
        for _ in range(2, K):
            tf_k = 2.0 * jnp.dot(tf_p.astype(jnp.bfloat16), PfT,
                                 preferred_element_type=jnp.float32) - tf_pp
            tb_k = 2.0 * jnp.dot(tb_p.astype(jnp.bfloat16), PbT,
                                 preferred_element_type=jnp.float32) - tb_pp
            pieces += [tf_k, tb_k]
            tf_pp, tf_p = tf_p, tf_k
            tb_pp, tb_p = tb_p, tb_k

    # One wide weight contraction instead of 2K narrow ones.
    t_all = jnp.concatenate(pieces, axis=0)                                 # [2KF, N]
    acc = jnp.dot(w_ref[...], t_all, preferred_element_type=jnp.float32)    # [2C, N]
    acc = acc + b_ref[...]                                                  # lane broadcast

    z = jax.nn.sigmoid(acc[:C, :])
    h_tilde = jnp.tanh(acc[C:, :])
    h_new = (1.0 - z) * h_tilde               # == z*H + (1-z)*h_tilde since H == 0
    h4 = jnp.maximum(h_new, 0.0)              # F.relu
    # Linear(C -> 1): sublane reduction over C, lane-dense over N.
    y_t = jnp.sum(h4 * wlin_ref[...], axis=0, keepdims=True) + blin_ref[...]
    y_ref[...] = y_t


def make_params(key, num_features, out_channels, K):
    """Full torch-equivalent parameter set (incl. r-gate / H-part rows that are
    mathematically dead for the H=None path the module always takes)."""
    fin = num_features + out_channels
    ks = jax.random.split(key, 8)
    s_dc = 1.0 / float(fin) ** 0.5
    s_lin = 1.0 / float(out_channels) ** 0.5

    def w(k, shape, scale):
        return (scale * jax.random.normal(k, shape)).astype(jnp.float32)

    return dict(
        wzf=w(ks[0], (K * fin, out_channels), s_dc),
        wzb=w(ks[1], (K * fin, out_channels), s_dc),
        wrf=w(ks[2], (K * fin, out_channels), s_dc),
        wrb=w(ks[3], (K * fin, out_channels), s_dc),
        whf=w(ks[4], (K * fin, out_channels), s_dc),
        whb=w(ks[5], (K * fin, out_channels), s_dc),
        bz=jnp.zeros((1, out_channels), jnp.float32),
        br=jnp.zeros((1, out_channels), jnp.float32),
        bh=jnp.zeros((1, out_channels), jnp.float32),
        wlin=w(ks[6], (1, out_channels), s_lin),
        blin=w(ks[7], (1, 1), s_lin),
    )


def _pack_gate_weights(params, F, C, K):
    """Wrapper-side layout plumbing: keep only the X-part rows of the z/h
    diffusion-conv weights (the H-part multiplies H == 0) and fuse everything
    into ONE weight slab ordered to match the in-kernel chain layout
    [hop0_fwd | hop0_bwd | hop1_fwd | hop1_bwd | ...]:
       W_all  : [2KF, 2C]  (columns: z | h)   ->  returned transposed [2C, 2KF]
       b_all  : [2C, 1]
    """
    fin = F + C

    def xrows(w, k):
        return w[k * fin:k * fin + F, :]           # [F, C] X-part rows of hop k

    blocks = []
    for k in range(K):
        blocks.append(jnp.concatenate([xrows(params["wzf"], k),
                                       xrows(params["whf"], k)], axis=1))  # fwd [F, 2C]
        blocks.append(jnp.concatenate([xrows(params["wzb"], k),
                                       xrows(params["whb"], k)], axis=1))  # bwd [F, 2C]
    w_all = jnp.concatenate(blocks, axis=0)                                # [2KF, 2C]
    b_all = jnp.concatenate([params["bz"], params["bh"]], axis=1)          # [1, 2C]
    return (w_all.T.astype(jnp.float32),           # [2C, 2KF]
            b_all.T.astype(jnp.float32))           # [2C, 1]


def _vmem_limit_bytes(default=48 * 1024 * 1024):
    """Per-generation VMEM limit (~3/4 of physical): ~96 MiB on v5e/v6e, ~48 MiB on v7x."""
    try:
        info = pltpu.get_tpu_info()
        cap = getattr(info, "vmem_capacity_bytes", None)
        if cap:
            return int(cap * 3 // 4)
    except Exception:
        pass
    return default


def my_adcrnn_forward(params, x, edge_index, edge_weight, h=None, c=None,
                      *, out_channels, K):
    """Equivalent of MY_ADCRNN_.forward -> (y, None, None); y has shape [N, 1]."""
    N, F = x.shape
    C = out_channels

    # Dense adjacency (to_dense_adj) + DCRNN transition matrices (plain JAX glue).
    A = jnp.zeros((N, N), jnp.float32).at[edge_index[0], edge_index[1]].add(
        edge_weight.astype(jnp.float32))
    deg_out = A.sum(axis=1)
    deg_in = A.sum(axis=0)
    inv_out = jnp.where(deg_out > 0, 1.0 / deg_out, 0.0)
    inv_in = jnp.where(deg_in > 0, 1.0 / deg_in, 0.0)
    Pf = inv_out[:, None] * A                 # D_out^{-1} A
    Pb = inv_in[:, None] * A.T                # D_in^{-1} A^T

    # Transposed (feature-major) operands for the kernel.
    pfT = Pf.T.astype(jnp.bfloat16)           # [N, N]
    pbT = Pb.T.astype(jnp.bfloat16)           # [N, N]
    xT = x.T.astype(jnp.float32)              # [F, N]
    w_all_t, b_all_t = _pack_gate_weights(params, F, C, K)
    wlin_t = params["wlin"].T.astype(jnp.float32)       # [C, 1]
    blin = params["blin"].astype(jnp.float32)            # [1, 1]

    flops = (4 * (K - 1) * N * N * F          # hop matmuls (fwd + bwd)
             + 8 * N * K * F * C              # fused weight contraction
             + 2 * N * C)                     # linear head
    bytes_acc = (2 * 2 * N * N                # bf16 PfT + PbT
                 + 4 * N * F                  # f32 X^T
                 + 4 * 2 * C * 2 * K * F      # fused weights
                 + 4 * N)                     # output
    cost = pl.CostEstimate(flops=int(flops), transcendentals=int(2 * N * C),
                           bytes_accessed=int(bytes_acc))

    kernel = functools.partial(_adcrnn_kernel, K=K, F=F, C=C)
    vmem = pl.BlockSpec(memory_space=pltpu.MemorySpace.VMEM)
    y_t = pl.pallas_call(
        kernel,
        out_shape=jax.ShapeDtypeStruct((1, N), jnp.float32),
        in_specs=[vmem] * 7,
        out_specs=vmem,
        compiler_params=pltpu.CompilerParams(vmem_limit_bytes=_vmem_limit_bytes()),
        cost_estimate=cost,
    )(pfT, pbT, xT, w_all_t, b_all_t, wlin_t, blin)
    return y_t.reshape(N, 1), None, None


if __name__ == "__main__":
    key = jax.random.PRNGKey(0)
    N, F, C, K = 16, 16, 8, 3           # small shapes: 16 nodes, 16 feats, 8 hidden, 3 hops
    k_x, k_w, k_p = jax.random.split(key, 3)

    x = jax.random.normal(k_x, (N, F), jnp.float32)
    # Simple directed graph: i -> i+1 and i -> i+2 (mod N); positive weights.
    src = jnp.concatenate([jnp.arange(N), jnp.arange(N)])
    dst = jnp.concatenate([(jnp.arange(N) + 1) % N, (jnp.arange(N) + 2) % N])
    edge_index = jnp.stack([src, dst]).astype(jnp.int32)
    edge_weight = jax.random.uniform(k_w, (2 * N,), jnp.float32, 0.5, 1.5)
    h = jnp.zeros((N, C), jnp.float32)  # ignored: the module sets h_1 = None
    c = None                            # ignored by the module

    params = make_params(k_p, F, C, K)
    y, _, _ = my_adcrnn_forward(params, x, edge_index, edge_weight, h, c,
                                out_channels=C, K=K)
    jax.block_until_ready(y)
    assert y.shape == (N, 1) and y.dtype == jnp.float32
    print("KERNEL_OK")
</pallas_src>

<mosaic_0001>
module attributes {stable_mosaic.version = 11 : i64} {
  func.func @_adcrnn_kernel(%arg0: memref<16x16xbf16, #tpu.memory_space<vmem>>, %arg1: memref<16x16xbf16, #tpu.memory_space<vmem>>, %arg2: memref<16x16xf32, #tpu.memory_space<vmem>>, %arg3: memref<16x96xf32, #tpu.memory_space<vmem>>, %arg4: memref<16x1xf32, #tpu.memory_space<vmem>>, %arg5: memref<8x1xf32, #tpu.memory_space<vmem>>, %arg6: memref<1x1xf32, #tpu.memory_space<vmem>>, %arg7: memref<1x16xf32, #tpu.memory_space<vmem>>) attributes {dimension_semantics = [], scalar_prefetch = 0 : i64, scratch_operands = 0 : i64, tpu.core_type = #tpu.core_type<tc>} {
    %c0 = arith.constant 0 : index
    %c0_0 = arith.constant 0 : index
    %0 = vector.load %arg0[%c0, %c0_0] : memref<16x16xbf16, #tpu.memory_space<vmem>>, vector<16x16xbf16>
    %c0_1 = arith.constant 0 : index
    %c0_2 = arith.constant 0 : index
    %1 = vector.load %arg1[%c0_1, %c0_2] : memref<16x16xbf16, #tpu.memory_space<vmem>>, vector<16x16xbf16>
    %c0_3 = arith.constant 0 : index
    %c0_4 = arith.constant 0 : index
    %2 = vector.load %arg2[%c0_3, %c0_4] : memref<16x16xf32, #tpu.memory_space<vmem>>, vector<16x16xf32>
    %3 = arith.truncf %2 : vector<16x16xf32> to vector<16x16xbf16>
    %cst = arith.constant dense<0.000000e+00> : vector<16x16xf32>
    %4 = tpu.matmul %3, %0, %cst {dimension_numbers = #tpu.dot_dimension_numbers<[1], [0], [0], [1], [0, 0, 1, 1], [], []>} : vector<16x16xbf16>, vector<16x16xbf16>, vector<16x16xf32> -> vector<16x16xf32>
    %cst_5 = arith.constant dense<0.000000e+00> : vector<16x16xf32>
    %5 = tpu.matmul %3, %1, %cst_5 {dimension_numbers = #tpu.dot_dimension_numbers<[1], [0], [0], [1], [0, 0, 1, 1], [], []>} : vector<16x16xbf16>, vector<16x16xbf16>, vector<16x16xf32> -> vector<16x16xf32>
    %6 = arith.truncf %4 : vector<16x16xf32> to vector<16x16xbf16>
    %cst_6 = arith.constant dense<0.000000e+00> : vector<16x16xf32>
    %7 = tpu.matmul %6, %0, %cst_6 {dimension_numbers = #tpu.dot_dimension_numbers<[1], [0], [0], [1], [0, 0, 1, 1], [], []>} : vector<16x16xbf16>, vector<16x16xbf16>, vector<16x16xf32> -> vector<16x16xf32>
    %cst_7 = arith.constant 2.000000e+00 : f32
    %8 = vector.broadcast %cst_7 : f32 to vector<16x16xf32>
    %9 = arith.mulf %8, %7 : vector<16x16xf32>
    %10 = arith.subf %9, %2 : vector<16x16xf32>
    %11 = arith.truncf %5 : vector<16x16xf32> to vector<16x16xbf16>
    %cst_8 = arith.constant dense<0.000000e+00> : vector<16x16xf32>
    %12 = tpu.matmul %11, %1, %cst_8 {dimension_numbers = #tpu.dot_dimension_numbers<[1], [0], [0], [1], [0, 0, 1, 1], [], []>} : vector<16x16xbf16>, vector<16x16xbf16>, vector<16x16xf32> -> vector<16x16xf32>
    %cst_9 = arith.constant 2.000000e+00 : f32
    %13 = vector.broadcast %cst_9 : f32 to vector<16x16xf32>
    %14 = arith.mulf %13, %12 : vector<16x16xf32>
    %15 = arith.subf %14, %2 : vector<16x16xf32>
    %16 = tpu.concatenate %2, %2, %4, %5, %10, %15 in 0 : vector<16x16xf32>, vector<16x16xf32>, vector<16x16xf32>, vector<16x16xf32>, vector<16x16xf32>, vector<16x16xf32> -> vector<96x16xf32>
    %c0_10 = arith.constant 0 : index
    %c0_11 = arith.constant 0 : index
    %17 = vector.load %arg3[%c0_10, %c0_11] : memref<16x96xf32, #tpu.memory_space<vmem>>, vector<16x96xf32>
    %cst_12 = arith.constant dense<0.000000e+00> : vector<16x16xf32>
    %18 = tpu.matmul %17, %16, %cst_12 {dimension_numbers = #tpu.dot_dimension_numbers<[1], [0], [0], [1], [0, 0, 1, 1], [], []>} : vector<16x96xf32>, vector<96x16xf32>, vector<16x16xf32> -> vector<16x16xf32>
    %c0_13 = arith.constant 0 : index
    %c0_14 = arith.constant 0 : index
    %19 = vector.load %arg4[%c0_13, %c0_14] : memref<16x1xf32, #tpu.memory_space<vmem>>, vector<16x1xf32>
    %20 = vector.broadcast %19 : vector<16x1xf32> to vector<16x16xf32>
    %21 = arith.addf %18, %20 : vector<16x16xf32>
    %22 = vector.extract_strided_slice %21 {offsets = [0, 0], sizes = [8, 16], strides = [1, 1]} : vector<16x16xf32> to vector<8x16xf32>
    %23 = arith.negf %22 : vector<8x16xf32>
    %24 = math.exp %23 : vector<8x16xf32>
    %cst_15 = arith.constant 1.000000e+00 : f32
    %25 = vector.broadcast %cst_15 : f32 to vector<8x16xf32>
    %26 = arith.addf %25, %24 : vector<8x16xf32>
    %27 = arith.divf %25, %26 : vector<8x16xf32>
    %28 = vector.extract_strided_slice %21 {offsets = [8, 0], sizes = [8, 16], strides = [1, 1]} : vector<16x16xf32> to vector<8x16xf32>
    %29 = math.tanh %28 : vector<8x16xf32>
    %cst_16 = arith.constant 1.000000e+00 : f32
    %30 = vector.broadcast %cst_16 : f32 to vector<8x16xf32>
    %31 = arith.subf %30, %27 : vector<8x16xf32>
    %32 = arith.mulf %31, %29 : vector<8x16xf32>
    %cst_17 = arith.constant 0.000000e+00 : f32
    %33 = vector.broadcast %cst_17 : f32 to vector<8x16xf32>
    %34 = arith.maximumf %32, %33 : vector<8x16xf32>
    %c0_18 = arith.constant 0 : index
    %c0_19 = arith.constant 0 : index
    %35 = vector.load %arg5[%c0_18, %c0_19] : memref<8x1xf32, #tpu.memory_space<vmem>>, vector<8x1xf32>
    %36 = vector.broadcast %35 : vector<8x1xf32> to vector<8x16xf32>
    %37 = arith.mulf %34, %36 : vector<8x16xf32>
    %cst_20 = arith.constant dense<0.000000e+00> : vector<16xf32>
    %38 = vector.multi_reduction <add>, %37, %cst_20 [0] : vector<8x16xf32> to vector<16xf32>
    %39 = vector.shape_cast %38 : vector<16xf32> to vector<1x16xf32>
    %c0_21 = arith.constant 0 : index
    %c0_22 = arith.constant 0 : index
    %40 = vector.load %arg6[%c0_21, %c0_22] : memref<1x1xf32, #tpu.memory_space<vmem>>, vector<1x1xf32>
    %41 = vector.broadcast %40 : vector<1x1xf32> to vector<1x16xf32>
    %42 = arith.addf %39, %41 : vector<1x16xf32>
    %c0_23 = arith.constant 0 : index
    %c0_24 = arith.constant 0 : index
    %43 = vector.load %arg7[%c0_23, %c0_24] : memref<1x16xf32, #tpu.memory_space<vmem>>, vector<1x16xf32>
    tpu.vector_store %arg7[%c0_23, %c0_24], %42 {strides = array<i32>} : memref<1x16xf32, #tpu.memory_space<vmem>>, vector<1x16xf32>,
    return
  }
}

</mosaic_0001>

<llo_original>
// kernel: tpu_custom_call.1
$region0: #{tpu_custom_call.1}
  #allocation0 [shape = 'u32[]', space=smem, size = 0x4, offset = 0x4, fixed_abs, tag = 'smem constant byte address 0x4 - core index']
  #allocation1 [shape = 'u32[144,128]{1,0:T(1,128)}', space=vmem, size = 0x12000, scoped, tag = 'internal scratch']
  #allocation2 [shape = 'f32[1,1]{1,0:T(1,128)S(1)}', space=vmem, size = 0x200, scoped, tag = 'scoped memory for tpu_custom_call.1']
  %s0 = inlined_call_operand.hbm [shape: bf16[16,16], index: 0, kind: input, shape index: {}]
  %s1 = inlined_call_operand.hbm [shape: bf16[16,16], index: 1, kind: input, shape index: {}]
  %s2 = inlined_call_operand.vmem [shape: f32[16,16], index: 2, kind: input, shape index: {}]
  %s3 = inlined_call_operand.vmem [shape: f32[16,96], index: 3, kind: input, shape index: {}]
  %s4 = inlined_call_operand.vmem [shape: f32[16,1], index: 4, kind: input, shape index: {}]
  %s5 = inlined_call_operand.vmem [shape: f32[8,1], index: 5, kind: input, shape index: {}]
  %s6 = inlined_call_operand.<no memory space> [shape: f32[1,1], index: 6, kind: input, shape index: {}]
  %s7 = inlined_call_operand.hbm [shape: f32[1,16], index: 7, kind: output, shape index: {}]
  %s8 = sld [smem:[#allocation0]]
  $region46: #{tpu_custom_call.1} parent=0
    _
  %s10 = ssub.s32 1, %s8
  %s11 = scalar_select 0, %s10, %s8
  %v12 = vstv %s6
  %13 = vst [vmem:[#allocation2] sm:$0x1] %v12
  $region1: #{tpu_custom_call.1} parent=0
    #allocation3 [shape = 'u8[4096]{0}', space=vmem, size = 0x1000, scoped, tag = 'input window, operand 0, single buffered']
    #allocation4 [shape = 's32[1]{0}', space=sflag, size = 0x4, scoped, tag = 'scoped memory for tpu_custom_call.1']
    #allocation5 [shape = 's32[1]{0}', space=sflag, size = 0x4, scoped, tag = 'scoped memory for tpu_custom_call.1']
    #allocation6 [shape = 'u8[4096]{0}', space=vmem, size = 0x1000, scoped, tag = 'input window, operand 1, single buffered']
    #allocation7 [shape = 's32[1]{0}', space=sflag, size = 0x4, scoped, tag = 'scoped memory for tpu_custom_call.1']
    #allocation8 [shape = 'u8[512]{0}', space=vmem, size = 0x400, scoped, tag = 'output window, operand 0, single buffered']
    %14 = vsyncpa [#allocation4], 0
    %15 = vsyncpa [#allocation7], 0
    %16 = vsyncpa [#allocation5], 0
    // Predicated region
    $region2: #{tpu_custom_call.1} parent=1 // pred_check
      _
    $region3: #{tpu_custom_call.1} parent=1 // pred_check_branch
      %18 = sbr.rel (0) target = $region5
    $region4: #{tpu_custom_call.1} parent=1 // pred_region
      %s20 = ssub.s32 128, 128
      %21 = vsyncadd [#allocation4], %s20
      %s22 = sshll.u32 [#allocation3], 4
      %s23 = int_to_ptr.vmem [resolvable:$true] %s22
      %28 = dma.hbm_to_vmem [thread:$0]  %s0, 128, %s23, [#allocation4], 64, 64, 4
    $region5: #{tpu_custom_call.1} parent=1 // pred_fallthru
      _
    // Predicated region
    $region6: #{tpu_custom_call.1} parent=1 // pred_check
      _
    $region7: #{tpu_custom_call.1} parent=1 // pred_check_branch
      %30 = sbr.rel (0) target = $region9
    $region8: #{tpu_custom_call.1} parent=1 // pred_region
      %s32 = ssub.s32 128, 128
      %33 = vsyncadd [#allocation7], %s32
      %s34 = sshll.u32 [#allocation6], 4
      %s35 = int_to_ptr.vmem [resolvable:$true] %s34
      %40 = dma.hbm_to_vmem [thread:$0]  %s1, 128, %s35, [#allocation7], 64, 64, 4
    $region9: #{tpu_custom_call.1} parent=1 // pred_fallthru
      _
    // Predicated region
    $region10: #{tpu_custom_call.1} parent=1 // pred_check
      _
    $region11: #{tpu_custom_call.1} parent=1 // pred_check_branch
      %42 = sbr.rel (0) target = $region13
    $region12: #{tpu_custom_call.1} parent=1 // pred_region
      _
    $region13: #{tpu_custom_call.1} parent=1 // pred_fallthru
      _
    // Predicated region
    $region14: #{tpu_custom_call.1} parent=1 // pred_check
      _
    $region15: #{tpu_custom_call.1} parent=1 // pred_check_branch
      %44 = sbr.rel (0) target = $region17
    $region16: #{tpu_custom_call.1} parent=1 // pred_region
      _
    $region17: #{tpu_custom_call.1} parent=1 // pred_fallthru
      _
    // Predicated region
    $region18: #{tpu_custom_call.1} parent=1 // pred_check
      _
    $region19: #{tpu_custom_call.1} parent=1 // pred_check_branch
      %46 = sbr.rel (0) target = $region21
    $region20: #{tpu_custom_call.1} parent=1 // pred_region
      _
    $region21: #{tpu_custom_call.1} parent=1 // pred_fallthru
      _
    // Predicated region
    $region22: #{tpu_custom_call.1} parent=1 // pred_check
      _
    $region23: #{tpu_custom_call.1} parent=1 // pred_check_branch
      %48 = sbr.rel (0) target = $region25
    $region24: #{tpu_custom_call.1} parent=1 // pred_region
      _
    $region25: #{tpu_custom_call.1} parent=1 // pred_fallthru
      _
    // Predicated region
    $region26: #{tpu_custom_call.1} parent=1 // pred_check
      _
    $region27: #{tpu_custom_call.1} parent=1 // pred_check_branch
      %50 = sbr.rel (0) target = $region29
    $region28: #{tpu_custom_call.1} parent=1 // pred_region
      _
    $region29: #{tpu_custom_call.1} parent=1 // pred_fallthru
      _
    // Predicated region
    $region30: #{tpu_custom_call.1} parent=1 // pred_check
      _
    $region31: #{tpu_custom_call.1} parent=1 // pred_check_branch
      %52 = sbr.rel (0) target = $region33
    $region32: #{tpu_custom_call.1} parent=1 // pred_region
      %53 = dma.done [#allocation4], 128
    $region33: #{tpu_custom_call.1} parent=1 // pred_fallthru
      _
    // Predicated region
    $region34: #{tpu_custom_call.1} parent=1 // pred_check
      _
    $region35: #{tpu_custom_call.1} parent=1 // pred_check_branch
      %55 = sbr.rel (0) target = $region37
    $region36: #{tpu_custom_call.1} parent=1 // pred_region
      %56 = dma.done [#allocation7], 128
    $region37: #{tpu_custom_call.1} parent=1 // pred_fallthru
      _
    %v58 = vld [vmem:[#allocation3] sm:$0xf]
    %v59 = vld [vmem:[#allocation3 + $0x4] sm:$0xf]
    %v60 = vld [vmem:[#allocation6] sm:$0xf]
    %v61 = vld [vmem:[#allocation6 + $0x4] sm:$0xf]
    %v62 = vld [vmem:[%s2] sm:$0xff]
    %v63 = vld [vmem:[%s2 + $0x8] sm:$0xff]
    %v64 = vpack.c.bf16 %v63, %v62
    %v67 = vunpack.c.l.b16 %v58
    %v68 = vunpack.c.l.b16 %v59
    %v69 = vpack.c.b16 %v68, %v67
    %vm71 = vcmask 130048
    %v73 = vsel %vm71, %v64, 0
    %75 = vmatprep.subr.bf16.mxu0 0
    %76 = vmatpush1.bf16.msra.mxu0 %v69
    %77 = vmatprep.subr.bf16.mxu0 0
    %78 = vmatpush1.bf16.msra.mxu0 0
    %79 = vmatprep.subr.bf16.mxu0 0
    %80 = vmatpush1.bf16.msra.mxu0 0
    %81 = vmatprep.subr.bf16.mxu0 0
    %82 = vmatpush1.bf16.msra.mxu0 0
    %83 = vmatprep.subr.bf16.mxu0 0
    %84 = vmatpush1.bf16.msra.mxu0 0
    %85 = vmatprep.subr.bf16.mxu0 0
    %86 = vmatpush1.bf16.msra.mxu0 0
    %87 = vmatprep.subr.bf16.mxu0 0
    %88 = vmatpush1.bf16.msra.mxu0 0
    %89 = vmatprep.subr.bf16.mxu0 0
    %90 = vmatpush1.bf16.msra.mxu0 0
    %91 = vmatprep.subr.bf16.mxu0 0
    %92 = vmatpush1.bf16.msra.mxu0 0
    %93 = vmatprep.subr.bf16.mxu0 0
    %94 = vmatpush1.bf16.msra.mxu0 0
    %95 = vmatprep.subr.bf16.mxu0 0
    %96 = vmatpush1.bf16.msra.mxu0 0
    %97 = vmatprep.subr.bf16.mxu0 0
    %98 = vmatpush1.bf16.msra.mxu0 0
    %99 = vmatprep.subr.bf16.mxu0 0
    %100 = vmatpush1.bf16.msra.mxu0 0
    %101 = vmatprep.subr.bf16.mxu0 0
    %102 = vmatpush1.bf16.msra.mxu0 0
    %103 = vmatprep.subr.bf16.mxu0 0
    %104 = vmatpush1.bf16.msra.mxu0 0
    %105 = vmatprep.subr.bf16.mxu0 0
    %106 = vmatpush1.bf16.msra.mxu0 0
    %107 = vmatprep.mubr.bf16.mxu0 0
    %108 = vmatmul.mubr.bf16.gmra.mrb[0].mxu0 %v73
    %v109 = vpop.f32.mrb[0].mxu0
    %v110 = vadd.f32 0.0, %v109
    %v111 = vpop.f32.mrb[0].mxu0
    %v112 = vpop.f32.mrb[0].mxu0
    %v113 = vadd.f32 0.0, %v112
    %v114 = vpop.f32.mrb[0].mxu0
    %115 = vdwg.mxu0
    %v118 = vunpack.c.l.b16 %v60
    %v119 = vunpack.c.l.b16 %v61
    %v120 = vpack.c.b16 %v119, %v118
    %122 = vmatprep.subr.bf16.mxu0 0
    %123 = vmatpush1.bf16.msra.mxu0 %v120
    %124 = vmatprep.subr.bf16.mxu0 0
    %125 = vmatpush1.bf16.msra.mxu0 0
    %126 = vmatprep.subr.bf16.mxu0 0
    %127 = vmatpush1.bf16.msra.mxu0 0
    %128 = vmatprep.subr.bf16.mxu0 0
    %129 = vmatpush1.bf16.msra.mxu0 0
    %130 = vmatprep.subr.bf16.mxu0 0
    %131 = vmatpush1.bf16.msra.mxu0 0
    %132 = vmatprep.subr.bf16.mxu0 0
    %133 = vmatpush1.bf16.msra.mxu0 0
    %134 = vmatprep.subr.bf16.mxu0 0
    %135 = vmatpush1.bf16.msra.mxu0 0
    %136 = vmatprep.subr.bf16.mxu0 0
    %137 = vmatpush1.bf16.msra.mxu0 0
    %138 = vmatprep.subr.bf16.mxu0 0
    %139 = vmatpush1.bf16.msra.mxu0 0
    %140 = vmatprep.subr.bf16.mxu0 0
    %141 = vmatpush1.bf16.msra.mxu0 0
    %142 = vmatprep.subr.bf16.mxu0 0
    %143 = vmatpush1.bf16.msra.mxu0 0
    %144 = vmatprep.subr.bf16.mxu0 0
    %145 = vmatpush1.bf16.msra.mxu0 0
    %146 = vmatprep.subr.bf16.mxu0 0
    %147 = vmatpush1.bf16.msra.mxu0 0
    %148 = vmatprep.subr.bf16.mxu0 0
    %149 = vmatpush1.bf16.msra.mxu0 0
    %150 = vmatprep.subr.bf16.mxu0 0
    %151 = vmatpush1.bf16.msra.mxu0 0
    %152 = vmatprep.subr.bf16.mxu0 0
    %153 = vmatpush1.bf16.msra.mxu0 0
    %154 = vmatprep.mubr.bf16.mxu0 0
    %155 = vmatmul.mubr.bf16.gmra.mrb[0].mxu0 %v73
    %v156 = vpop.f32.mrb[0].mxu0
    %v157 = vadd.f32 0.0, %v156
    %v158 = vpop.f32.mrb[0].mxu0
    %v159 = vpop.f32.mrb[0].mxu0
    %v160 = vadd.f32 0.0, %v159
    %v161 = vpop.f32.mrb[0].mxu0
    %162 = vdwg.mxu0
    %v163 = vpack.c.bf16 %v113, %v110
    %v165 = vsel %vm71, %v163, 0
    %167 = vmatprep.subr.bf16.mxu0 0
    %168 = vmatpush1.bf16.msra.mxu0 %v69
    %169 = vmatprep.subr.bf16.mxu0 0
    %170 = vmatpush1.bf16.msra.mxu0 0
    %171 = vmatprep.subr.bf16.mxu0 0
    %172 = vmatpush1.bf16.msra.mxu0 0
    %173 = vmatprep.subr.bf16.mxu0 0
    %174 = vmatpush1.bf16.msra.mxu0 0
    %175 = vmatprep.subr.bf16.mxu0 0
    %176 = vmatpush1.bf16.msra.mxu0 0
    %177 = vmatprep.subr.bf16.mxu0 0
    %178 = vmatpush1.bf16.msra.mxu0 0
    %179 = vmatprep.subr.bf16.mxu0 0
    %180 = vmatpush1.bf16.msra.mxu0 0
    %181 = vmatprep.subr.bf16.mxu0 0
    %182 = vmatpush1.bf16.msra.mxu0 0
    %183 = vmatprep.subr.bf16.mxu0 0
    %184 = vmatpush1.bf16.msra.mxu0 0
    %185 = vmatprep.subr.bf16.mxu0 0
    %186 = vmatpush1.bf16.msra.mxu0 0
    %187 = vmatprep.subr.bf16.mxu0 0
    %188 = vmatpush1.bf16.msra.mxu0 0
    %189 = vmatprep.subr.bf16.mxu0 0
    %190 = vmatpush1.bf16.msra.mxu0 0
    %191 = vmatprep.subr.bf16.mxu0 0
    %192 = vmatpush1.bf16.msra.mxu0 0
    %193 = vmatprep.subr.bf16.mxu0 0
    %194 = vmatpush1.bf16.msra.mxu0 0
    %195 = vmatprep.subr.bf16.mxu0 0
    %196 = vmatpush1.bf16.msra.mxu0 0
    %197 = vmatprep.subr.bf16.mxu0 0
    %198 = vmatpush1.bf16.msra.mxu0 0
    %199 = vmatprep.mubr.bf16.mxu0 0
    %200 = vmatmul.mubr.bf16.gmra.mrb[0].mxu0 %v165
    %v201 = vpop.f32.mrb[0].mxu0
    %v202 = vadd.f32 0.0, %v201
    %v203 = vpop.f32.mrb[0].mxu0
    %v204 = vpop.f32.mrb[0].mxu0
    %v205 = vadd.f32 0.0, %v204
    %v206 = vpop.f32.mrb[0].mxu0
    %207 = vdwg.mxu0
    %v208 = vmul.f32 %v202, 2.0
    %v209 = vmul.f32 %v205, 2.0
    %v210 = vsub.f32 %v208, %v62
    %v211 = vsub.f32 %v209, %v63
    %v212 = vpack.c.bf16 %v160, %v157
    %v214 = vsel %vm71, %v212, 0
    %216 = vmatprep.subr.bf16.mxu0 0
    %217 = vmatpush1.bf16.msra.mxu0 %v120
    %218 = vmatprep.subr.bf16.mxu0 0
    %219 = vmatpush1.bf16.msra.mxu0 0
    %220 = vmatprep.subr.bf16.mxu0 0
    %221 = vmatpush1.bf16.msra.mxu0 0
    %222 = vmatprep.subr.bf16.mxu0 0
    %223 = vmatpush1.bf16.msra.mxu0 0
    %224 = vmatprep.subr.bf16.mxu0 0
    %225 = vmatpush1.bf16.msra.mxu0 0
    %226 = vmatprep.subr.bf16.mxu0 0
    %227 = vmatpush1.bf16.msra.mxu0 0
    %228 = vmatprep.subr.bf16.mxu0 0
    %229 = vmatpush1.bf16.msra.mxu0 0
    %230 = vmatprep.subr.bf16.mxu0 0
    %231 = vmatpush1.bf16.msra.mxu0 0
    %232 = vmatprep.subr.bf16.mxu0 0
    %233 = vmatpush1.bf16.msra.mxu0 0
    %234 = vmatprep.subr.bf16.mxu0 0
    %235 = vmatpush1.bf16.msra.mxu0 0
    %236 = vmatprep.subr.bf16.mxu0 0
    %237 = vmatpush1.bf16.msra.mxu0 0
    %238 = vmatprep.subr.bf16.mxu0 0
    %239 = vmatpush1.bf16.msra.mxu0 0
    %240 = vmatprep.subr.bf16.mxu0 0
    %241 = vmatpush1.bf16.msra.mxu0 0
    %242 = vmatprep.subr.bf16.mxu0 0
    %243 = vmatpush1.bf16.msra.mxu0 0
    %244 = vmatprep.subr.bf16.mxu0 0
    %245 = vmatpush1.bf16.msra.mxu0 0
    %246 = vmatprep.subr.bf16.mxu0 0
    %247 = vmatpush1.bf16.msra.mxu0 0
    %248 = vmatprep.mubr.bf16.mxu0 0
    %249 = vmatmul.mubr.bf16.gmra.mrb[0].mxu0 %v214
    %v250 = vpop.f32.mrb[0].mxu0
    %v251 = vadd.f32 0.0, %v250
    %v252 = vpop.f32.mrb[0].mxu0
    %v253 = vpop.f32.mrb[0].mxu0
    %v254 = vadd.f32 0.0, %v253
    %v255 = vpop.f32.mrb[0].mxu0
    %256 = vdwg.mxu0
    %v257 = vmul.f32 %v251, 2.0
    %v258 = vmul.f32 %v254, 2.0
    %v259 = vsub.f32 %v257, %v62
    %v260 = vsub.f32 %v258, %v63
    %v261 = vld [vmem:[%s3] sm:$0xff]
    %v262 = vld [vmem:[%s3 + $0x8] sm:$0xff]
    %v263 = vld [vmem:[%s4] sm:$0xff]
    %v264 = vld [vmem:[%s4 + $0x8] sm:$0xff]
    %266 = vset.pattern.permute.xlu0 0
    %267 = vperm.xlu0 %266, %v263
    %v268 = vpop.permute.xlu0 %267
    %271 = vset.pattern.permute.xlu0 0
    %272 = vperm.xlu0 %271, %v264
    %v273 = vpop.permute.xlu0 %272
    %vm275 = vcmask 785408
    %v277 = vsel %vm275, %v261, 0
    %v280 = vsel %vm275, %v262, 0
    %282 = vmatprep.subr.mxu0 0.0
    %283 = vmatpush1.msra.mxu0 %v62
    %284 = vmatprep.subr.mxu0 0.0
    %285 = vmatpush1.msra.mxu0 %v63
    %286 = vmatprep.subr.mxu0 0.0
    %287 = vmatpush1.msra.mxu0 %v62
    %288 = vmatprep.subr.mxu0 0.0
    %289 = vmatpush1.msra.mxu0 %v63
    %290 = vmatprep.subr.mxu0 0.0
    %291 = vmatpush1.msra.mxu0 %v110
    %292 = vmatprep.subr.mxu0 0.0
    %293 = vmatpush1.msra.mxu0 %v113
    %294 = vmatprep.subr.mxu0 0.0
    %295 = vmatpush1.msra.mxu0 %v157
    %296 = vmatprep.subr.mxu0 0.0
    %297 = vmatpush1.msra.mxu0 %v160
    %298 = vmatprep.subr.mxu0 0.0
    %299 = vmatpush1.msra.mxu0 %v210
    %300 = vmatprep.subr.mxu0 0.0
    %301 = vmatpush1.msra.mxu0 %v211
    %302 = vmatprep.subr.mxu0 0.0
    %303 = vmatpush1.msra.mxu0 %v259
    %304 = vmatprep.subr.mxu0 0.0
    %305 = vmatpush1.msra.mxu0 %v260
    %306 = vmatprep.subr.mxu0 0.0
    %307 = vmatpush1.msra.mxu0 0.0
    %308 = vmatprep.subr.mxu0 0.0
    %309 = vmatpush1.msra.mxu0 0.0
    %310 = vmatprep.subr.mxu0 0.0
    %311 = vmatpush1.msra.mxu0 0.0
    %312 = vmatprep.subr.mxu0 0.0
    %313 = vmatpush1.msra.mxu0 0.0
    %314 = vmatprep.subr.mxu0 0.0
    %315 = vmatpush1.msra.mxu0 0.0
    %316 = vmatprep.subr.mxu0 0.0
    %317 = vmatpush1.msra.mxu0 0.0
    %318 = vmatprep.subr.mxu0 0.0
    %319 = vmatpush1.msra.mxu0 0.0
    %320 = vmatprep.subr.mxu0 0.0
    %321 = vmatpush1.msra.mxu0 0.0
    %322 = vmatprep.subr.mxu0 0.0
    %323 = vmatpush1.msra.mxu0 0.0
    %324 = vmatprep.subr.mxu0 0.0
    %325 = vmatpush1.msra.mxu0 0.0
    %326 = vmatprep.subr.mxu0 0.0
    %327 = vmatpush1.msra.mxu0 0.0
    %328 = vmatprep.subr.mxu0 0.0
    %329 = vmatpush1.msra.mxu0 0.0
    %330 = vmatprep.subr.mxu0 0.0
    %331 = vmatpush1.msra.mxu0 0.0
    %332 = vmatprep.subr.mxu0 0.0
    %333 = vmatpush1.msra.mxu0 0.0
    %334 = vmatprep.subr.mxu0 0.0
    %335 = vmatpush1.msra.mxu0 0.0
    %336 = vmatprep.subr.mxu0 0.0
    %337 = vmatpush1.msra.mxu0 0.0
    %338 = vmatprep.subr.mxu0 0.0
    %339 = vmatpush1.msra.mxu0 0.0
    %340 = vmatprep.subr.mxu0 0.0
    %341 = vmatpush1.msra.mxu0 0.0
    %342 = vmatprep.subr.mxu0 0.0
    %343 = vmatpush1.msra.mxu0 0.0
    %344 = vmatprep.subr.mxu0 0.0
    %345 = vmatpush1.msra.mxu0 0.0
    %346 = vmatprep.mubr.f32.mxu0 0.0
    %347 = vmatmul.mubr.f32.gmra.mrb[0].mxu0 %v277
    %v348 = vpop.f32.mrb[0].mxu0
    %v349 = vadd.f32 %v268, %v348
    %v350 = vpop.f32.mrb[0].mxu0
    %351 = vmatprep.mubr.f32.mxu0 0.0
    %352 = vmatmul.mubr.f32.gmra.mrb[0].mxu0 %v280
    %v353 = vpop.f32.mrb[0].mxu0
    %v354 = vadd.f32 %v273, %v353
    %v355 = vpop.f32.mrb[0].mxu0
    %356 = vdwg.mxu0
    %v357 = vxor.u32 %v349, 2147483648
    %v358 = vmul.f32 %v357, 1.442695
    %v359 = vpow.pop %v358
    %v360 = vadd.f32 %v359, 1.0
    %v361 = vrcp.pop %v360
    %v362 = vmul.f32 1.0, %v361
    %v363 = vtanh.pop %v354
    %v364 = vsub.f32 1.0, %v362
    %v365 = vmul.f32 %v364, %v363
    %v366 = vmax.f32 %v365, 0.0
    %v367 = vld [vmem:[%s5] sm:$0xff]
    %369 = vset.pattern.permute.xlu0 0
    %370 = vperm.xlu0 %369, %v367
    %v371 = vpop.permute.xlu0 %370
    %v373 = vmul.f32 %v366, %v371
    %v374 = vsel %vm71, %v373, 0.0
    %v375 = vrot.slane %v374, 4
    %v376 = vadd.f32 %v374, %v375
    %v377 = vrot.slane %v376, 2
    %v378 = vadd.f32 %v376, %v377
    %v379 = vrot.slane %v378, 1
    %v380 = vadd.f32 %v378, %v379
    %v381 = vld [vmem:[#allocation2] sm:$0x1]
    %383 = vset.pattern.permute.xlu0 0
    %384 = vperm.xlu0 %383, %v381
    %v385 = vpop.permute.xlu0 %384
    %v387 = vlaneseq
    %v388 = vshrl.u32 %v387, 7
    %v389 = vsub.s32 0, %v388
    %v390 = vrot.slane %v385, %v389
    %v391 = vadd.f32 %v380, %v390
    %vm392 = vcmask 122880
    %393 = vst.msk [vmem:[#allocation8] sm:$0x1] %vm392, %v391
    // Predicated region
    $region38: #{tpu_custom_call.1} parent=1 // pred_check
      _
    $region39: #{tpu_custom_call.1} parent=1 // pred_check_branch
      %395 = sbr.rel (0) target = $region41
    $region40: #{tpu_custom_call.1} parent=1 // pred_region
      %s397 = ssub.s32 16, 16
      %398 = vsyncadd [#allocation5], %s397
      %s400 = sshll.u32 [#allocation8], 4
      %s401 = int_to_ptr.vmem [resolvable:$true] %s400
      %403 = dma.vmem_to_hbm [thread:$0]  %s401, 16, %s7, [#allocation5]
    $region41: #{tpu_custom_call.1} parent=1 // pred_fallthru
      _
    // Predicated region
    $region42: #{tpu_custom_call.1} parent=1 // pred_check
      _
    $region43: #{tpu_custom_call.1} parent=1 // pred_check_branch
      %405 = sbr.rel (0) target = $region45
    $region44: #{tpu_custom_call.1} parent=1 // pred_region
      %406 = dma.done [#allocation5], 16
    $region45: #{tpu_custom_call.1} parent=1 // pred_fallthru
      _
    %407 = vsyncpa [#allocation4], 1
    %408 = vsyncpa [#allocation7], 1
    %409 = vsyncpa [#allocation5], 1

</llo_original>
